<compile_context>
chip_gen: v6e
topology: v6e:2x2x1
jax: 0.10.0
libtpu: 0.0.40
codegen_flags: <defaults>
</compile_context>

<pallas_src>
import functools
import math

import jax
import jax.numpy as jnp
from jax.experimental import pallas as pl
from jax.experimental.pallas import tpu as pltpu


_SMOOTH = 1.0
_TILE_D_MAX = 16384  # max lanes per fallback block (bounds in-kernel unroll to 128 chunks)


def _round_up(a: int, m: int) -> int:
    return ((a + m - 1) // m) * m


def _sublane_pack(itemsize: int) -> int:
    # Native sublane packing: 8 for 4-byte, 16 for 2-byte, 32 for 1-byte dtypes.
    return max(8, 32 // max(itemsize, 1))


def _pick_block_bytes() -> int:
    """Per-input bytes per pipeline step.

    ~2 MiB keeps the ~0.35us fixed grid-step overhead <15% on v5e/v6e; v7x's
    ~3.2 TB/s HBM wants ~4 MiB. Best-effort hardware query; the 2 MiB fallback
    is safe and near-optimal on every generation.
    """
    try:
        info = pltpu.get_tpu_info()
        vmem = getattr(info, "vmem_capacity_bytes", None)
        if vmem is not None and vmem <= (64 << 20):  # v7x-class: 64 MiB VMEM / TC
            return 4 << 20
    except Exception:
        pass
    return 2 << 20


def _vmem_limit_bytes(buf_bytes: int, scratch_bytes: int) -> int:
    # 2 inputs x 2 pipeline buffers + accumulators + headroom, clamped so we
    # never ask for less than the smallest default scoped limit (16 MiB, v5e)
    # nor more than fits comfortably on v7x (64 MiB physical).
    need = 4 * buf_bytes + scratch_bytes
    return int(min(max(2 * need + (2 << 20), 16 << 20), 48 << 20))


def _round_batch_tile(bn: int, n: int, pack: int) -> int:
    """Valid batch tile for 2-D blocks: multiple of 8 (ideally `pack`) or full N."""
    bn = max(1, min(int(bn), n))
    if bn >= n:
        return n
    if n < 8:
        return n
    if bn >= pack:
        return (bn // pack) * pack
    return max(8, (bn // 8) * 8)


def _dice_kernel_lane_dense(x_ref, t_ref, o_ref, inter_acc, denom_acc, *,
                            g_total, smooth):
    """Primary path: (bn, ts, 128) blocks of the (N, D//128, 128) view."""
    j = pl.program_id(1)
    nd = pl.num_programs(1)

    @pl.when(j == 0)
    def _init():
        inter_acc[...] = jnp.zeros_like(inter_acc)
        denom_acc[...] = jnp.zeros_like(denom_acc)

    # Native-dtype block in VMEM; f32 upcast in-kernel (min HBM bytes, f32 acc).
    x = x_ref[...].astype(jnp.float32)          # (bn, ts, 128)
    t = t_ref[...].astype(jnp.float32)
    ts = x.shape[1]

    def _accumulate(xv, tv):
        # Lane-wise partials: VPU adds + a sublane-axis fold; the expensive
        # cross-lane (XLU) reduce is deferred to the final step per row block.
        inter_acc[...] += jnp.sum(xv * tv, axis=1)    # (bn, 128)
        denom_acc[...] += jnp.sum(xv + tv, axis=1)    # (bn, 128)  sum(x)+sum(t) merged

    if g_total % ts != 0:                       # static: ragged sublane tail exists
        last = nd - 1

        @pl.when(j != last)                     # steady state: no mask work at all
        def _steady():
            _accumulate(x, t)

        @pl.when(j == last)                     # only the last D step pays the mask
        def _tail():
            g_idx = j * ts + jax.lax.broadcasted_iota(jnp.int32, (1, ts, 1), 1)
            valid = g_idx < g_total
            _accumulate(jnp.where(valid, x, 0.0), jnp.where(valid, t, 0.0))
    else:
        _accumulate(x, t)

    @pl.when(j == nd - 1)
    def _finalize():
        inter = jnp.sum(inter_acc[...], axis=1, keepdims=True)   # (bn, 1) XLU once/row
        denom = jnp.sum(denom_acc[...], axis=1, keepdims=True)
        dice = 2.0 * (inter + smooth) / (denom + smooth)
        o_ref[...] = dice[:, :, None]                            # (bn, 1, 1)


def _dice_kernel_lane_chunked(x_ref, t_ref, o_ref, inter_acc, denom_acc, *,
                              d_total, smooth):
    """Fallback (D % 128 != 0): (bn, tile_d) blocks, ragged lane tail masked."""
    j = pl.program_id(1)
    nd = pl.num_programs(1)

    @pl.when(j == 0)
    def _init():
        inter_acc[...] = jnp.zeros_like(inter_acc)
        denom_acc[...] = jnp.zeros_like(denom_acc)

    x = x_ref[...].astype(jnp.float32)          # (bn, tile_d)
    t = t_ref[...].astype(jnp.float32)
    bn, tile_d = x.shape

    def _accumulate(xv, tv):
        if tile_d % 128 == 0:
            # Fold the lane axis with vreg-aligned 128-wide slices into (bn,128)
            # lane partials: pure VPU in the steady state, no per-step XLU.
            ip = jnp.zeros((bn, 128), jnp.float32)
            dp = jnp.zeros((bn, 128), jnp.float32)
            for c in range(tile_d // 128):      # static unroll, <= 128 chunks
                xc = xv[:, c * 128:(c + 1) * 128]
                tc = tv[:, c * 128:(c + 1) * 128]
                ip = ip + xc * tc
                dp = dp + xc + tc
            inter_acc[...] += ip
            denom_acc[...] += dp
        else:
            # Only reachable when D < 128 (single full-width block, nd == 1):
            # one tiny lane reduce per row block — negligible.
            inter_acc[:, 0:1] += jnp.sum(xv * tv, axis=1, keepdims=True)
            denom_acc[:, 0:1] += jnp.sum(xv + tv, axis=1, keepdims=True)

    if d_total % tile_d != 0:                   # static: ragged lane tail exists
        last = nd - 1

        @pl.when(j != last)
        def _steady():
            _accumulate(x, t)

        @pl.when(j == last)
        def _tail():
            lane = j * tile_d + jax.lax.broadcasted_iota(jnp.int32, (1, tile_d), 1)
            valid = lane < d_total
            _accumulate(jnp.where(valid, x, 0.0), jnp.where(valid, t, 0.0))
    else:
        _accumulate(x, t)

    @pl.when(j == nd - 1)
    def _finalize():
        inter = jnp.sum(inter_acc[...], axis=1, keepdims=True)   # (bn, 1)
        denom = jnp.sum(denom_acc[...], axis=1, keepdims=True)
        o_ref[...] = 2.0 * (inter + smooth) / (denom + smooth)


def dice_loss(inputs: jax.Array, targets: jax.Array, *,
              block_bytes: int | None = None) -> jax.Array:
    """Dice loss over (N, ...) inputs/targets. Returns a scalar float32."""
    assert inputs.shape == targets.shape
    n = inputs.shape[0]
    d = math.prod(inputs.shape[1:])
    if block_bytes is None:
        block_bytes = _pick_block_bytes()

    # Free row-major flatten, identical to torch .view(N, -1). No pad, no cast.
    x = inputs.reshape(n, d)
    t = targets.reshape(n, d)
    itemsize = max(x.dtype.itemsize, t.dtype.itemsize)
    pack = _sublane_pack(itemsize)

    if d % 128 == 0:
        # Lane-dense layout: (N, G, 128) is a free row-major reshape.
        g = d // 128
        x3 = x.reshape(n, g, 128)
        t3 = t.reshape(n, g, 128)
        row_bytes = d * itemsize

        if row_bytes <= block_bytes:
            # Small/medium rows: whole row per block, batch-tile to keep each
            # pipeline step near block_bytes even when D is tiny.
            ts = g
            bn = max(1, min(n, block_bytes // max(row_bytes, 1)))
        else:
            # Big rows: tile D; ts rounded to the dtype's sublane packing.
            ts = min(max(pack, (block_bytes // (128 * itemsize) // pack) * pack), g)
            bn = 1
        nb = pl.cdiv(n, bn)
        nd = pl.cdiv(g, ts)

        buf_bytes = bn * _round_up(ts, 8) * 128 * itemsize
        scratch_bytes = 2 * _round_up(bn, 8) * 128 * 4

        dice = pl.pallas_call(
            functools.partial(_dice_kernel_lane_dense, g_total=g, smooth=_SMOOTH),
            out_shape=jax.ShapeDtypeStruct((n, 1, 1), jnp.float32),
            grid=(nb, nd),
            in_specs=[
                pl.BlockSpec((bn, ts, 128), lambda i, j: (i, j, 0)),
                pl.BlockSpec((bn, ts, 128), lambda i, j: (i, j, 0)),
            ],
            out_specs=pl.BlockSpec((bn, 1, 1), lambda i, j: (i, 0, 0)),
            scratch_shapes=[
                pltpu.VMEM((bn, 128), jnp.float32),   # lane-wise intersection partials
                pltpu.VMEM((bn, 128), jnp.float32),   # lane-wise sum(x)+sum(t) partials
            ],
            compiler_params=pltpu.CompilerParams(
                dimension_semantics=("parallel", "arbitrary"),
                vmem_limit_bytes=_vmem_limit_bytes(buf_bytes, scratch_bytes),
            ),
        )(x3, t3)
        dice = dice[:, 0, 0]
    else:
        # Fallback: tile lanes directly (128-aligned tiles, ragged tail masked)
        # and tile the batch so VMEM stays bounded and v7x gets a parallel axis.
        d_lane = (d // 128) * 128
        tile_d = d if d_lane == 0 else min(d_lane, _TILE_D_MAX)
        nd = pl.cdiv(d, tile_d)
        bn = _round_batch_tile(block_bytes // max(tile_d * itemsize, 1), n, pack)
        nb = pl.cdiv(n, bn)

        buf_bytes = _round_up(bn, 8) * _round_up(tile_d, 128) * itemsize
        scratch_bytes = 2 * _round_up(bn, 8) * 128 * 4

        dice = pl.pallas_call(
            functools.partial(_dice_kernel_lane_chunked, d_total=d, smooth=_SMOOTH),
            out_shape=jax.ShapeDtypeStruct((n, 1), jnp.float32),
            grid=(nb, nd),
            in_specs=[
                pl.BlockSpec((bn, tile_d), lambda i, j: (i, j)),
                pl.BlockSpec((bn, tile_d), lambda i, j: (i, j)),
            ],
            out_specs=pl.BlockSpec((bn, 1), lambda i, j: (i, 0)),
            scratch_shapes=[
                pltpu.VMEM((bn, 128), jnp.float32),
                pltpu.VMEM((bn, 128), jnp.float32),
            ],
            compiler_params=pltpu.CompilerParams(
                dimension_semantics=("parallel", "arbitrary"),
                vmem_limit_bytes=_vmem_limit_bytes(buf_bytes, scratch_bytes),
            ),
        )(x, t)
        dice = dice[:, 0]

    # Tiny O(N) epilogue kept in the wrapper so the batch grid axis stays parallel.
    return 1.0 - jnp.sum(dice) / jnp.float32(n)


def dice_loss_ref(inputs, targets):
    n = inputs.shape[0]
    x = inputs.reshape(n, -1).astype(jnp.float32)
    t = targets.reshape(n, -1).astype(jnp.float32)
    inter = jnp.sum(x * t, axis=1)
    dice = 2.0 * (inter + _SMOOTH) / (jnp.sum(x, axis=1) + jnp.sum(t, axis=1) + _SMOOTH)
    return 1.0 - jnp.sum(dice) / n


if __name__ == "__main__":
    key = jax.random.PRNGKey(0)
    k1, k2, k3 = jax.random.split(key, 3)

    def check(inputs, targets, name, **kw):
        out = jax.block_until_ready(dice_loss(inputs, targets, **kw))
        ref = dice_loss_ref(inputs, targets)
        assert jnp.allclose(out, ref, rtol=1e-5, atol=1e-5), (name, out, ref)

    # Primary case: NCHW segmentation-style tensors, D = 4*16*16 = 1024.
    shape = (2, 4, 16, 16)
    probs = jax.nn.sigmoid(jax.random.normal(k1, shape, dtype=jnp.float32))
    mask = (jax.random.uniform(k2, shape) > 0.5).astype(jnp.float32)
    check(probs, mask, "f32_aligned")

    # Native bf16 activations (upcast to f32 happens inside the kernel).
    check(probs.astype(jnp.bfloat16), mask, "bf16_aligned")

    # Batch-tiled primary path: bn=4, multiple batch blocks, aligned and ragged N.
    shape_b = (16, 4, 16, 16)
    pb = jax.nn.sigmoid(jax.random.normal(k3, shape_b, dtype=jnp.float32))
    mb = (jax.random.uniform(k1, shape_b) > 0.5).astype(jnp.float32)
    check(pb, mb, "f32_batch_tiled", block_bytes=16384)
    shape_r = (6, 4, 16, 16)
    pr = jax.nn.sigmoid(jax.random.normal(k2, shape_r, dtype=jnp.float32))
    mr = (jax.random.uniform(k3, shape_r) > 0.5).astype(jnp.float32)
    check(pr, mr, "f32_batch_tiled_ragged_n", block_bytes=16384)

    # Force multiple D tiles + gated ragged-tail sublane masking on the
    # lane-dense path (D = 4*16*20 = 1280 -> 10 sublane groups, ts = 8, 2 tiles).
    shape2 = (2, 4, 16, 20)
    p2 = jax.nn.sigmoid(jax.random.normal(k3, shape2, dtype=jnp.float32))
    m2 = (jax.random.uniform(k2, shape2) > 0.5).astype(jnp.float32)
    check(p2, m2, "f32_masked_tail", block_bytes=4096)

    # D not a multiple of 128 (D = 300): lane-chunked fallback path, masked tail.
    shape3 = (2, 3, 10, 10)
    p3 = jax.nn.sigmoid(jax.random.normal(k1, shape3, dtype=jnp.float32))
    m3 = (jax.random.uniform(k3, shape3) > 0.5).astype(jnp.float32)
    check(p3, m3, "f32_ragged_d", block_bytes=1024)
    check(p3, m3, "f32_ragged_d_default_blocks")

    # D < 128 (D = 81): fallback single narrow full-width block per batch tile.
    shape4 = (4, 1, 9, 9)
    p4 = jax.nn.sigmoid(jax.random.normal(k2, shape4, dtype=jnp.float32))
    m4 = (jax.random.uniform(k1, shape4) > 0.5).astype(jnp.float32)
    check(p4, m4, "f32_tiny_d")

    print("KERNEL_OK")
</pallas_src>

<mosaic_0001>
module attributes {stable_mosaic.version = 11 : i64} {
  func.func @_dice_kernel_lane_dense(%arg0: i32, %arg1: i32, %arg2: memref<2x8x128xf32, #tpu.memory_space<vmem>>, %arg3: memref<2x8x128xf32, #tpu.memory_space<vmem>>, %arg4: memref<2x1x1xf32, #tpu.memory_space<vmem>>, %arg5: memref<2x128xf32, #tpu.memory_space<vmem>>, %arg6: memref<2x128xf32, #tpu.memory_space<vmem>>) attributes {dimension_semantics = [#tpu.dimension_semantics<parallel>, #tpu.dimension_semantics<arbitrary>], iteration_bounds = array<i64: 1, 1>, scalar_prefetch = 0 : i64, scratch_operands = 2 : i64, tpu.core_type = #tpu.core_type<tc>, window_params = [{transform_indices = @transform_0, window_bounds = array<i64: 2, 8, 128>}, {transform_indices = @transform_1, window_bounds = array<i64: 2, 8, 128>}, {transform_indices = @transform_2, window_bounds = array<i64: 2, 1, 1>}]} {
    %c0_i32 = arith.constant 0 : i32
    %0 = arith.cmpi eq, %arg1, %c0_i32 : i32
    %1 = arith.extui %0 : i1 to i32
    %c0_i32_0 = arith.constant 0 : i32
    %2 = arith.cmpi ne, %1, %c0_i32_0 : i32
    scf.if %2 {
      %cst_17 = arith.constant 0.000000e+00 : f32
      %18 = vector.broadcast %cst_17 : f32 to vector<2x128xf32>
      %c0_18 = arith.constant 0 : index
      %c0_19 = arith.constant 0 : index
      %19 = vector.load %arg5[%c0_18, %c0_19] : memref<2x128xf32, #tpu.memory_space<vmem>>, vector<2x128xf32>
      tpu.vector_store %arg5[%c0_18, %c0_19], %18 {strides = array<i32>} : memref<2x128xf32, #tpu.memory_space<vmem>>, vector<2x128xf32>,
      %cst_20 = arith.constant 0.000000e+00 : f32
      %20 = vector.broadcast %cst_20 : f32 to vector<2x128xf32>
      %c0_21 = arith.constant 0 : index
      %c0_22 = arith.constant 0 : index
      %21 = vector.load %arg6[%c0_21, %c0_22] : memref<2x128xf32, #tpu.memory_space<vmem>>, vector<2x128xf32>
      tpu.vector_store %arg6[%c0_21, %c0_22], %20 {strides = array<i32>} : memref<2x128xf32, #tpu.memory_space<vmem>>, vector<2x128xf32>,
    } else {
    }
    %c0 = arith.constant 0 : index
    %c0_1 = arith.constant 0 : index
    %c0_2 = arith.constant 0 : index
    %3 = vector.load %arg2[%c0, %c0_1, %c0_2] : memref<2x8x128xf32, #tpu.memory_space<vmem>>, vector<2x8x128xf32>
    %c0_3 = arith.constant 0 : index
    %c0_4 = arith.constant 0 : index
    %c0_5 = arith.constant 0 : index
    %4 = vector.load %arg3[%c0_3, %c0_4, %c0_5] : memref<2x8x128xf32, #tpu.memory_space<vmem>>, vector<2x8x128xf32>
    %c0_6 = arith.constant 0 : index
    %c0_7 = arith.constant 0 : index
    %5 = vector.load %arg5[%c0_6, %c0_7] : memref<2x128xf32, #tpu.memory_space<vmem>>, vector<2x128xf32>
    %6 = arith.mulf %3, %4 : vector<2x8x128xf32>
    %cst = arith.constant dense<0.000000e+00> : vector<2x128xf32>
    %7 = vector.multi_reduction <add>, %6, %cst [1] : vector<2x8x128xf32> to vector<2x128xf32>
    %8 = arith.addf %5, %7 : vector<2x128xf32>
    %c0_8 = arith.constant 0 : index
    %c0_9 = arith.constant 0 : index
    %9 = vector.load %arg5[%c0_8, %c0_9] : memref<2x128xf32, #tpu.memory_space<vmem>>, vector<2x128xf32>
    tpu.vector_store %arg5[%c0_8, %c0_9], %8 {strides = array<i32>} : memref<2x128xf32, #tpu.memory_space<vmem>>, vector<2x128xf32>,
    %c0_10 = arith.constant 0 : index
    %c0_11 = arith.constant 0 : index
    %10 = vector.load %arg6[%c0_10, %c0_11] : memref<2x128xf32, #tpu.memory_space<vmem>>, vector<2x128xf32>
    %11 = arith.addf %3, %4 : vector<2x8x128xf32>
    %cst_12 = arith.constant dense<0.000000e+00> : vector<2x128xf32>
    %12 = vector.multi_reduction <add>, %11, %cst_12 [1] : vector<2x8x128xf32> to vector<2x128xf32>
    %13 = arith.addf %10, %12 : vector<2x128xf32>
    %c0_13 = arith.constant 0 : index
    %c0_14 = arith.constant 0 : index
    %14 = vector.load %arg6[%c0_13, %c0_14] : memref<2x128xf32, #tpu.memory_space<vmem>>, vector<2x128xf32>
    tpu.vector_store %arg6[%c0_13, %c0_14], %13 {strides = array<i32>} : memref<2x128xf32, #tpu.memory_space<vmem>>, vector<2x128xf32>,
    %c0_i32_15 = arith.constant 0 : i32
    %15 = arith.cmpi eq, %arg1, %c0_i32_15 : i32
    %16 = arith.extui %15 : i1 to i32
    %c0_i32_16 = arith.constant 0 : i32
    %17 = arith.cmpi ne, %16, %c0_i32_16 : i32
    scf.if %17 {
      %c0_17 = arith.constant 0 : index
      %c0_18 = arith.constant 0 : index
      %18 = vector.load %arg5[%c0_17, %c0_18] : memref<2x128xf32, #tpu.memory_space<vmem>>, vector<2x128xf32>
      %cst_19 = arith.constant dense<0.000000e+00> : vector<2xf32>
      %19 = vector.multi_reduction <add>, %18, %cst_19 [1] : vector<2x128xf32> to vector<2xf32>
      %20 = vector.shape_cast %19 : vector<2xf32> to vector<2x1xf32>
      %c0_20 = arith.constant 0 : index
      %c0_21 = arith.constant 0 : index
      %21 = vector.load %arg6[%c0_20, %c0_21] : memref<2x128xf32, #tpu.memory_space<vmem>>, vector<2x128xf32>
      %cst_22 = arith.constant dense<0.000000e+00> : vector<2xf32>
      %22 = vector.multi_reduction <add>, %21, %cst_22 [1] : vector<2x128xf32> to vector<2xf32>
      %23 = vector.shape_cast %22 : vector<2xf32> to vector<2x1xf32>
      %cst_23 = arith.constant 1.000000e+00 : f32
      %24 = vector.broadcast %cst_23 : f32 to vector<2x1xf32>
      %25 = arith.addf %20, %24 : vector<2x1xf32>
      %cst_24 = arith.constant 2.000000e+00 : f32
      %26 = vector.broadcast %cst_24 : f32 to vector<2x1xf32>
      %27 = arith.mulf %26, %25 : vector<2x1xf32>
      %cst_25 = arith.constant 1.000000e+00 : f32
      %28 = vector.broadcast %cst_25 : f32 to vector<2x1xf32>
      %29 = arith.addf %23, %28 : vector<2x1xf32>
      %30 = arith.divf %27, %29 : vector<2x1xf32>
      %31 = vector.shape_cast %30 : vector<2x1xf32> to vector<2x1x1xf32>
      %c0_26 = arith.constant 0 : index
      %c0_27 = arith.constant 0 : index
      %c0_28 = arith.constant 0 : index
      %32 = vector.load %arg4[%c0_26, %c0_27, %c0_28] : memref<2x1x1xf32, #tpu.memory_space<vmem>>, vector<2x1x1xf32>
      tpu.vector_store %arg4[%c0_26, %c0_27, %c0_28], %31 {strides = array<i32>} : memref<2x1x1xf32, #tpu.memory_space<vmem>>, vector<2x1x1xf32>,
    } else {
    }
    return
  }
  func.func @transform_0(%arg0: i32, %arg1: i32) -> (i32, i32, i32) {
    %c0_i32 = arith.constant 0 : i32
    %c0_i32_0 = arith.constant 0 : i32
    return %arg0, %arg1, %c0_i32 : i32, i32, i32
  }
  func.func @transform_1(%arg0: i32, %arg1: i32) -> (i32, i32, i32) {
    %c0_i32 = arith.constant 0 : i32
    %c0_i32_0 = arith.constant 0 : i32
    return %arg0, %arg1, %c0_i32 : i32, i32, i32
  }
  func.func @transform_2(%arg0: i32, %arg1: i32) -> (i32, i32, i32) {
    %c0_i32 = arith.constant 0 : i32
    %c0_i32_0 = arith.constant 0 : i32
    %c0_i32_1 = arith.constant 0 : i32
    return %arg0, %c0_i32, %c0_i32_0 : i32, i32, i32
  }
}

</mosaic_0001>

<llo_original>
// kernel: tpu_custom_call.1
$region0: #{tpu_custom_call.1}
  #allocation0 [shape = 'u32[]', space=smem, size = 0x4, offset = 0x4, fixed_abs, tag = 'smem constant byte address 0x4 - core index']
  #allocation1 [shape = 'u32[144,128]{1,0:T(1,128)}', space=vmem, size = 0x12000, scoped, tag = 'internal scratch']
  #allocation2 [shape = 'f32[2,128]{1,0:T(2,128)}', space=vmem, size = 0x400, scoped, tag = 'scratch operand']
  #allocation3 [shape = 'f32[2,128]{1,0:T(2,128)}', space=vmem, size = 0x400, scoped, tag = 'scratch operand']
  %s0 = inlined_call_operand.hbm [shape: f32[2,8,128], index: 0, kind: input, shape index: {}]
  %s1 = inlined_call_operand.hbm [shape: f32[2,8,128], index: 1, kind: input, shape index: {}]
  %s2 = inlined_call_operand.vmem [shape: f32[2,1,1], index: 2, kind: output, shape index: {}]
  %s3 = sld [smem:[#allocation0]]
  $region34: #{tpu_custom_call.1} parent=0
    _
  %s5 = ssub.s32 1, %s3
  %s6 = scalar_select 0, %s5, %s3
  $region1: #{tpu_custom_call.1} parent=0
    #allocation4 [shape = 'u8[8192]{0}', space=vmem, size = 0x2000, scoped, tag = 'input window, operand 0, single buffered']
    #allocation5 [shape = 's32[1]{0}', space=sflag, size = 0x4, scoped, tag = 'scoped memory for tpu_custom_call.1']
    #allocation6 [shape = 'u8[8192]{0}', space=vmem, size = 0x2000, scoped, tag = 'input window, operand 1, single buffered']
    #allocation7 [shape = 's32[1]{0}', space=sflag, size = 0x4, scoped, tag = 'scoped memory for tpu_custom_call.1']
    %7 = vsyncpa [#allocation5], 0
    %8 = vsyncpa [#allocation7], 0
    // Predicated region
    $region2: #{tpu_custom_call.1} parent=1 // pred_check
      _
    $region3: #{tpu_custom_call.1} parent=1 // pred_check_branch
      %10 = sbr.rel (0) target = $region5
    $region4: #{tpu_custom_call.1} parent=1 // pred_region
      %s12 = ssub.s32 256, 256
      %13 = vsyncadd [#allocation5], %s12
      %s14 = sshll.u32 [#allocation4], 4
      %s15 = int_to_ptr.vmem [resolvable:$true] %s14
      %20 = dma.hbm_to_vmem [thread:$0]  %s0, 256, %s15, [#allocation5], 128, 128, 8
    $region5: #{tpu_custom_call.1} parent=1 // pred_fallthru
      _
    // Predicated region
    $region6: #{tpu_custom_call.1} parent=1 // pred_check
      _
    $region7: #{tpu_custom_call.1} parent=1 // pred_check_branch
      %22 = sbr.rel (0) target = $region9
    $region8: #{tpu_custom_call.1} parent=1 // pred_region
      %s24 = ssub.s32 256, 256
      %25 = vsyncadd [#allocation7], %s24
      %s26 = sshll.u32 [#allocation6], 4
      %s27 = int_to_ptr.vmem [resolvable:$true] %s26
      %32 = dma.hbm_to_vmem [thread:$0]  %s1, 256, %s27, [#allocation7], 128, 128, 8
    $region9: #{tpu_custom_call.1} parent=1 // pred_fallthru
      _
    // Predicated region
    $region10: #{tpu_custom_call.1} parent=1 // pred_check
      _
    $region11: #{tpu_custom_call.1} parent=1 // pred_check_branch
      %34 = sbr.rel (0) target = $region13
    $region12: #{tpu_custom_call.1} parent=1 // pred_region
      %35 = dma.done [#allocation5], 256
    $region13: #{tpu_custom_call.1} parent=1 // pred_fallthru
      _
    // Predicated region
    $region14: #{tpu_custom_call.1} parent=1 // pred_check
      _
    $region15: #{tpu_custom_call.1} parent=1 // pred_check_branch
      %37 = sbr.rel (0) target = $region17
    $region16: #{tpu_custom_call.1} parent=1 // pred_region
      %38 = dma.done [#allocation7], 256
    $region17: #{tpu_custom_call.1} parent=1 // pred_fallthru
      _
    %p39 = scmp.eq.s32.totalorder 0, 0
    // Predicated region
    $region18: #{tpu_custom_call.1} parent=1 // pred_check
      %p40 = pneg %p39
    $region19: #{tpu_custom_call.1} parent=1 // pred_check_branch
      %42 = sbr.rel (%p40) target = $region21
    $region20: #{tpu_custom_call.1} parent=1 // pred_region
      %43 = vst [vmem:[#allocation2] sm:$0x3] 0.0
      %44 = vst [vmem:[#allocation3] sm:$0x3] 0.0
    $region21: #{tpu_custom_call.1} parent=1 // pred_fallthru
      _
    %v45 = vld [vmem:[#allocation4] sm:$0xff]
    %v46 = vld [vmem:[#allocation4 + $0x8] sm:$0xff]
    %v47 = vld [vmem:[#allocation6] sm:$0xff]
    %v48 = vld [vmem:[#allocation6 + $0x8] sm:$0xff]
    %v49 = vld [vmem:[#allocation2] sm:$0x3]
    %v50 = vmul.f32 %v45, %v47
    %v51 = vmul.f32 %v46, %v48
    %v52 = vrot.slane %v50, 4
    %v53 = vadd.f32 %v50, %v52
    %v54 = vrot.slane %v53, 2
    %v55 = vadd.f32 %v53, %v54
    %v56 = vrot.slane %v55, 1
    %v57 = vadd.f32 %v55, %v56
    %v58 = vrot.slane %v51, 4
    %v59 = vadd.f32 %v51, %v58
    %v60 = vrot.slane %v59, 2
    %v61 = vadd.f32 %v59, %v60
    %v62 = vrot.slane %v61, 1
    %v63 = vadd.f32 %v61, %v62
    %vm66 = vcmask 1041409
    %v67 = vsel %vm66, %v63, %v57
    %v69 = vadd.f32 %v49, %v67
    %70 = vst [vmem:[#allocation2] sm:$0x3] %v69
    %v71 = vld [vmem:[#allocation3] sm:$0x3]
    %v72 = vadd.f32 %v45, %v47
    %v73 = vadd.f32 %v46, %v48
    %v74 = vrot.slane %v72, 4
    %v75 = vadd.f32 %v72, %v74
    %v76 = vrot.slane %v75, 2
    %v77 = vadd.f32 %v75, %v76
    %v78 = vrot.slane %v77, 1
    %v79 = vadd.f32 %v77, %v78
    %v80 = vrot.slane %v73, 4
    %v81 = vadd.f32 %v73, %v80
    %v82 = vrot.slane %v81, 2
    %v83 = vadd.f32 %v81, %v82
    %v84 = vrot.slane %v83, 1
    %v85 = vadd.f32 %v83, %v84
    %v88 = vsel %vm66, %v85, %v79
    %v90 = vadd.f32 %v71, %v88
    %91 = vst [vmem:[#allocation3] sm:$0x3] %v90
    // Predicated region
    $region22: #{tpu_custom_call.1} parent=1 // pred_check
      %p92 = pneg %p39
    $region23: #{tpu_custom_call.1} parent=1 // pred_check_branch
      %94 = sbr.rel (%p92) target = $region25
    $region24: #{tpu_custom_call.1} parent=1 // pred_region
      %v95 = vld [vmem:[#allocation2] sm:$0x3]
      %vm96 = vcmask 1041408
      %v97 = vsel %vm96, %v95, 0.0
      %98 = vadd.xlane.f32.xlu0 %v97
      %v99 = vpop.xlane.xlu0 %98
      %v100 = vld [vmem:[#allocation3] sm:$0x3]
      %v101 = vsel %vm96, %v100, 0.0
      %102 = vadd.xlane.f32.xlu0 %v101
      %v103 = vpop.xlane.xlu0 %102
      %v104 = vadd.f32 %v99, 1.0
      %v105 = vmul.f32 %v104, 2.0
      %v106 = vadd.f32 %v103, 1.0
      %v107 = vrcp.pop %v106
      %v108 = vmul.f32 %v105, %v107
      %v110 = vlaneseq
      %v111 = vshrl.u32 %v110, 7
      %v112 = vsub.s32 0, %v111
      %v113 = vrot.slane %v108, %v112
      %v114 = vlaneseq
      %v115 = vshrl.u32 %v114, 7
      %v116 = vsub.s32 1, %v115
      %v117 = vrot.slane %v108, %v116
      %vm120 = vcmask 0
      %121 = vst.msk [vmem:[%s2] sm:$0x1] %vm120, %v113
      %122 = vst.msk [vmem:[%s2 + $0x1] sm:$0x1] %vm120, %v117
    $region25: #{tpu_custom_call.1} parent=1 // pred_fallthru
      _
    // Predicated region
    $region26: #{tpu_custom_call.1} parent=1 // pred_check
      _
    $region27: #{tpu_custom_call.1} parent=1 // pred_check_branch
      %124 = sbr.rel (0) target = $region29
    $region28: #{tpu_custom_call.1} parent=1 // pred_region
      _
    $region29: #{tpu_custom_call.1} parent=1 // pred_fallthru
      _
    // Predicated region
    $region30: #{tpu_custom_call.1} parent=1 // pred_check
      _
    $region31: #{tpu_custom_call.1} parent=1 // pred_check_branch
      %126 = sbr.rel (0) target = $region33
    $region32: #{tpu_custom_call.1} parent=1 // pred_region
      _
    $region33: #{tpu_custom_call.1} parent=1 // pred_fallthru
      _
    %127 = vsyncpa [#allocation5], 1
    %128 = vsyncpa [#allocation7], 1

</llo_original>
